<compile_context>
chip_gen: v7x
topology: tpu7x:2x2x1
jax: 0.10.0
libtpu: 0.0.40
codegen_flags: <defaults>
</compile_context>

<pallas_src>
import jax
import jax.numpy as jnp
from jax import lax
from jax.experimental import pallas as pl
from jax.experimental.pallas import tpu as pltpu

EPS = 1e-5
K = 5  # transposed-conv kernel size

# Polyphase tap table for ConvTranspose2d(k=5, stride=2, pad=2, output_pad=1):
#   out[n, 2m+ro, 2c+rc, co] =
#       sum_{(dh,dw,kh,kw) in PHASE_TAPS[ro*2+rc]} xpad[n, m+dh, c+dw, :] @ W[:, co, kh, kw]
# where xpad is the input zero-padded by 1 on each spatial side (no weight flip
# needed in this direct form).
_PARITY = {0: (0, 2), 1: (1, 2), 2: (0, 1), 3: (1, 1), 4: (0, 0)}  # k -> (output parity, window offset)
PHASE_TAPS = {p: [] for p in range(4)}
for _kh in range(K):
    _ro, _dh = _PARITY[_kh]
    for _kw in range(K):
        _rc, _dw = _PARITY[_kw]
        PHASE_TAPS[_ro * 2 + _rc].append((_dh, _dw, _kh, _kw))


# ----------------------------- Pallas kernels ------------------------------

def linear_bn_relu_kernel(x_ref, w_ref, g_ref, b_ref, o_ref):
    # x: (N, Din), w: (Din, F), g/b: (1, F), o: (N, F)
    y = jnp.dot(x_ref[...], w_ref[...], preferred_element_type=jnp.float32)
    mean = jnp.mean(y, axis=0, keepdims=True)
    var = jnp.mean((y - mean) ** 2, axis=0, keepdims=True)   # biased (BN train mode)
    yn = (y - mean) * lax.rsqrt(var + EPS)
    o_ref[...] = jnp.maximum(yn * g_ref[...] + b_ref[...], 0.0)


def _phase_accumulate(x_ref, w_ref, taps, h, w, cin, cout):
    """Sum of per-tap slab matmuls for one output-parity phase.

    Each tap is ONE (h*w, cin) x (cin, cout) MXU matmul in bf16 with f32
    accumulation.  Two independent accumulators keep the adds off a single
    serial dependence chain.
    """
    acc = [None, None]
    for t, (dh, dw, kh, kw) in enumerate(taps):
        xs = x_ref[0, dh:dh + h, dw:dw + w, :].reshape(h * w, cin)
        contrib = jnp.dot(xs, w_ref[kh * K + kw],
                          preferred_element_type=jnp.float32)
        s = t & 1
        acc[s] = contrib if acc[s] is None else acc[s] + contrib
    return acc[0] if acc[1] is None else acc[0] + acc[1]


def make_deconv_conv_kernel(h, w):
    """Polyphase deconv for one image: pre-BN activations + BN partial stats.

    x_ref:    (1, h+2, w+2, Cin)  bf16 (padded input, one image)
    w_ref:    (25, Cin, Cout)     bf16 (tap-major weights, index = kh*5+kw)
    pre_ref:  (1, h*w, 4*Cout)    f32  (phase-blocked lanes -> lane-dense store)
    stat_ref: (1, 2, Cout)        f32  (per-image sum and sum of squares)
    """
    def kernel(x_ref, w_ref, pre_ref, stat_ref):
        cin, cout = w_ref.shape[1], w_ref.shape[2]
        s_sum = jnp.zeros((1, cout), jnp.float32)
        s_sq = jnp.zeros((1, cout), jnp.float32)
        phases = []
        for p in range(4):
            acc = _phase_accumulate(x_ref, w_ref, PHASE_TAPS[p], h, w, cin, cout)
            phases.append(acc)
            s_sum = s_sum + jnp.sum(acc, axis=0, keepdims=True)
            s_sq = s_sq + jnp.sum(acc * acc, axis=0, keepdims=True)
        pre_ref[0] = jnp.concatenate(phases, axis=-1)
        stat_ref[0] = jnp.concatenate([s_sum, s_sq], axis=0)
    return kernel


def bn_relu_kernel(pre_ref, stat_ref, g_ref, b_ref, o_ref):
    """Vectorized BN(train stats)+ReLU over one image's phase-blocked slab.

    pre_ref: (1, h*w, 4*Cout) f32   stat_ref: (N, 2, Cout) f32 (full batch)
    g/b:     (1, Cout) f32          o_ref:    (1, h*w, 4*Cout) bf16
    """
    n_total = stat_ref.shape[0]
    count = n_total * pre_ref.shape[1] * 4            # N * (2h) * (2w) elements/channel
    inv = 1.0 / float(count)
    st = jnp.sum(stat_ref[...], axis=0)               # (2, Cout)
    mean = st[0:1, :] * inv
    var = st[1:2, :] * inv - mean * mean               # biased variance
    scale = g_ref[...] * lax.rsqrt(var + EPS)
    shift = b_ref[...] - mean * scale
    scale4 = jnp.tile(scale, (1, 4))                   # same channels in each phase block
    shift4 = jnp.tile(shift, (1, 4))
    o_ref[0] = jnp.maximum(pre_ref[0] * scale4 + shift4, 0.0).astype(o_ref.dtype)


def make_deconv_bias_tanh_kernel(h, w):
    """Final polyphase deconv + bias + tanh for one image (f32 out)."""
    def kernel(x_ref, w_ref, b_ref, o_ref):
        cin, cout = w_ref.shape[1], w_ref.shape[2]
        phases = []
        for p in range(4):
            acc = _phase_accumulate(x_ref, w_ref, PHASE_TAPS[p], h, w, cin, cout)
            phases.append(jnp.tanh(acc + b_ref[...]))
        o_ref[0] = jnp.concatenate(phases, axis=-1)    # (h*w, 4*Cout): 4x denser store
    return kernel


# ------------------------------ wrappers -----------------------------------

def _full_spec(shape):
    nd = len(shape)
    return pl.BlockSpec(shape, lambda *_, nd=nd: (0,) * nd)


_SEQ = pltpu.CompilerParams(dimension_semantics=("arbitrary",))
_PAR = pltpu.CompilerParams(dimension_semantics=("parallel",))


def linear_bn_relu(x, w, gamma, beta):
    n, din = x.shape
    f = w.shape[1]
    return pl.pallas_call(
        linear_bn_relu_kernel,
        out_shape=jax.ShapeDtypeStruct((n, f), jnp.float32),
        grid=(1,),
        in_specs=[_full_spec((n, din)), _full_spec((din, f)),
                  _full_spec((1, f)), _full_spec((1, f))],
        out_specs=_full_spec((n, f)),
        compiler_params=_SEQ,
    )(x, w, gamma.reshape(1, f), beta.reshape(1, f))


def _prep_taps(w_pt):
    # torch ConvTranspose2d weight (Cin, Cout, 5, 5) -> (25, Cin, Cout) bf16.
    cin, cout = w_pt.shape[0], w_pt.shape[1]
    return jnp.transpose(w_pt, (2, 3, 0, 1)).reshape(K * K, cin, cout).astype(jnp.bfloat16)


def _interleave_phases(flat, n, h, w, cout):
    # (N, h*w, 4*Cout) with lanes ordered (ro, rc, co) -> (N, 2h, 2w, Cout)
    y = flat.reshape(n, h, w, 2, 2, cout)
    y = jnp.transpose(y, (0, 1, 3, 2, 4, 5))
    return y.reshape(n, 2 * h, 2 * w, cout)


def deconv_bn_relu(act, w_pt, gamma, beta):
    """ConvTranspose2d(5, s=2, p=2, op=1, no bias) + BatchNorm2d + ReLU (NHWC bf16)."""
    n, h, w, cin = act.shape
    cout = w_pt.shape[1]
    xpad = jnp.pad(act, ((0, 0), (1, 1), (1, 1), (0, 0)))
    w_taps = _prep_taps(w_pt)

    pre, stats = pl.pallas_call(
        make_deconv_conv_kernel(h, w),
        out_shape=(jax.ShapeDtypeStruct((n, h * w, 4 * cout), jnp.float32),
                   jax.ShapeDtypeStruct((n, 2, cout), jnp.float32)),
        grid=(n,),
        in_specs=[pl.BlockSpec((1, h + 2, w + 2, cin), lambda i: (i, 0, 0, 0)),
                  pl.BlockSpec((K * K, cin, cout), lambda i: (0, 0, 0))],
        out_specs=(pl.BlockSpec((1, h * w, 4 * cout), lambda i: (i, 0, 0)),
                   pl.BlockSpec((1, 2, cout), lambda i: (i, 0, 0))),
        compiler_params=_PAR,
    )(xpad, w_taps)

    act_out = pl.pallas_call(
        bn_relu_kernel,
        out_shape=jax.ShapeDtypeStruct((n, h * w, 4 * cout), jnp.bfloat16),
        grid=(n,),
        in_specs=[pl.BlockSpec((1, h * w, 4 * cout), lambda i: (i, 0, 0)),
                  pl.BlockSpec((n, 2, cout), lambda i: (0, 0, 0)),
                  pl.BlockSpec((1, cout), lambda i: (0, 0)),
                  pl.BlockSpec((1, cout), lambda i: (0, 0))],
        out_specs=pl.BlockSpec((1, h * w, 4 * cout), lambda i: (i, 0, 0)),
        compiler_params=_PAR,
    )(pre, stats, gamma.reshape(1, cout), beta.reshape(1, cout))

    return _interleave_phases(act_out, n, h, w, cout)


def deconv_bias_tanh(act, w_pt, bias):
    """Final ConvTranspose2d(5, s=2, p=2, op=1, bias) + Tanh (NHWC, f32 out)."""
    n, h, w, cin = act.shape
    cout = w_pt.shape[1]
    xpad = jnp.pad(act, ((0, 0), (1, 1), (1, 1), (0, 0)))
    w_taps = _prep_taps(w_pt)

    out = pl.pallas_call(
        make_deconv_bias_tanh_kernel(h, w),
        out_shape=jax.ShapeDtypeStruct((n, h * w, 4 * cout), jnp.float32),
        grid=(n,),
        in_specs=[pl.BlockSpec((1, h + 2, w + 2, cin), lambda i: (i, 0, 0, 0)),
                  pl.BlockSpec((K * K, cin, cout), lambda i: (0, 0, 0)),
                  pl.BlockSpec((1, cout), lambda i: (0, 0))],
        out_specs=pl.BlockSpec((1, h * w, 4 * cout), lambda i: (i, 0, 0)),
        compiler_params=_PAR,
    )(xpad, w_taps, bias.reshape(1, cout).astype(jnp.float32))

    return _interleave_phases(out, n, h, w, cout)


def generator_forward(x, params):
    dim = params["dim"]
    n = x.shape[0]
    # l1: Linear(no bias) + BatchNorm1d + ReLU
    y = linear_bn_relu(x, params["w1"], params["g1"], params["b1"])        # (N, dim*8*16) f32
    # view(N, -1, 4, 4), go NHWC + bf16 for the conv kernels
    y = y.reshape(n, dim * 8, 4, 4)
    y = jnp.transpose(y, (0, 2, 3, 1)).astype(jnp.bfloat16)                # (N, 4, 4, 8*dim)
    # l2_5
    y = deconv_bn_relu(y, params["wt1"], params["g2"], params["b2"])       # (N,  8,  8, 4*dim)
    y = deconv_bn_relu(y, params["wt2"], params["g3"], params["b3"])       # (N, 16, 16, 2*dim)
    y = deconv_bn_relu(y, params["wt3"], params["g4"], params["b4"])       # (N, 32, 32, dim)
    y = deconv_bias_tanh(y, params["wt4"], params["bias4"])                # (N, 64, 64, 3) f32
    return jnp.transpose(y, (0, 3, 1, 2))                                  # NCHW (N, 3, 64, 64)


# -------------------------- deterministic params ---------------------------

def init_params(key, in_dim, dim):
    f = dim * 8 * 4 * 4
    ks = jax.random.split(key, 12)
    p = {"dim": dim}
    p["w1"] = 0.02 * jax.random.normal(ks[0], (in_dim, f), jnp.float32)     # Linear weight (transposed)
    p["g1"] = 1.0 + 0.02 * jax.random.normal(ks[1], (f,), jnp.float32)      # BN1d gamma ~ N(1, .02)
    p["b1"] = jnp.zeros((f,), jnp.float32)                                  # BN1d beta = 0
    chans = [dim * 8, dim * 4, dim * 2, dim, 3]
    for i in range(4):
        cin, cout = chans[i], chans[i + 1]
        # ConvTranspose2d weight (torch layout (Cin, Cout, 5, 5)) ~ N(0, 0.02)
        p[f"wt{i + 1}"] = 0.02 * jax.random.normal(ks[2 + 2 * i], (cin, cout, K, K), jnp.float32)
        if i < 3:
            p[f"g{i + 2}"] = 1.0 + 0.02 * jax.random.normal(ks[3 + 2 * i], (cout,), jnp.float32)
            p[f"b{i + 2}"] = jnp.zeros((cout,), jnp.float32)
        else:
            p["bias4"] = 0.02 * jax.random.normal(ks[3 + 2 * i], (cout,), jnp.float32)
    return p


if __name__ == "__main__":
    key = jax.random.PRNGKey(0)
    k_x, k_p = jax.random.split(key)
    N, IN_DIM, DIM = 2, 32, 16          # small: output is (2, 3, 64, 64)
    params = init_params(k_p, IN_DIM, DIM)
    x = jax.random.normal(k_x, (N, IN_DIM), jnp.float32)

    out = generator_forward(x, params)
    out = jax.block_until_ready(out)

    assert out.shape == (N, 3, 64, 64), out.shape
    assert jnp.all(jnp.isfinite(out))
    assert jnp.all(jnp.abs(out) <= 1.0 + 1e-5)   # tanh range
    print("KERNEL_OK")
</pallas_src>

<mosaic_0001>
module attributes {stable_mosaic.version = 11 : i64} {
  func.func @linear_bn_relu_kernel(%arg0: i32, %arg1: memref<2x32xf32, #tpu.memory_space<vmem>>, %arg2: memref<32x2048xf32, #tpu.memory_space<vmem>>, %arg3: memref<1x2048xf32, #tpu.memory_space<vmem>>, %arg4: memref<1x2048xf32, #tpu.memory_space<vmem>>, %arg5: memref<2x2048xf32, #tpu.memory_space<vmem>>) attributes {dimension_semantics = [#tpu.dimension_semantics<arbitrary>], iteration_bounds = array<i64: 1>, scalar_prefetch = 0 : i64, scratch_operands = 0 : i64, tpu.core_type = #tpu.core_type<tc>, window_params = [{pipeline_mode = #tpu.pipeline_mode<synchronous>, transform_indices = @transform_0, window_bounds = array<i64: 2, 32>}, {pipeline_mode = #tpu.pipeline_mode<synchronous>, transform_indices = @transform_1, window_bounds = array<i64: 32, 2048>}, {pipeline_mode = #tpu.pipeline_mode<synchronous>, transform_indices = @transform_2, window_bounds = array<i64: 1, 2048>}, {pipeline_mode = #tpu.pipeline_mode<synchronous>, transform_indices = @transform_3, window_bounds = array<i64: 1, 2048>}, {pipeline_mode = #tpu.pipeline_mode<synchronous>, transform_indices = @transform_4, window_bounds = array<i64: 2, 2048>}]} {
    %c0 = arith.constant 0 : index
    %c0_0 = arith.constant 0 : index
    %0 = vector.load %arg1[%c0, %c0_0] : memref<2x32xf32, #tpu.memory_space<vmem>>, vector<2x32xf32>
    %c0_1 = arith.constant 0 : index
    %c0_2 = arith.constant 0 : index
    %1 = vector.load %arg2[%c0_1, %c0_2] : memref<32x2048xf32, #tpu.memory_space<vmem>>, vector<32x2048xf32>
    %cst = arith.constant dense<0.000000e+00> : vector<2x2048xf32>
    %2 = tpu.matmul %0, %1, %cst {dimension_numbers = #tpu.dot_dimension_numbers<[1], [0], [0], [1], [0, 0, 1, 1], [], []>} : vector<2x32xf32>, vector<32x2048xf32>, vector<2x2048xf32> -> vector<2x2048xf32>
    %cst_3 = arith.constant dense<0.000000e+00> : vector<2048xf32>
    %3 = vector.multi_reduction <add>, %2, %cst_3 [0] : vector<2x2048xf32> to vector<2048xf32>
    %4 = vector.shape_cast %3 : vector<2048xf32> to vector<1x2048xf32>
    %cst_4 = arith.constant 2.000000e+00 : f32
    %5 = vector.broadcast %cst_4 : f32 to vector<1x2048xf32>
    %6 = arith.divf %4, %5 : vector<1x2048xf32>
    %7 = vector.broadcast %6 : vector<1x2048xf32> to vector<2x2048xf32>
    %8 = arith.subf %2, %7 : vector<2x2048xf32>
    %9 = arith.mulf %8, %8 : vector<2x2048xf32>
    %cst_5 = arith.constant dense<0.000000e+00> : vector<2048xf32>
    %10 = vector.multi_reduction <add>, %9, %cst_5 [0] : vector<2x2048xf32> to vector<2048xf32>
    %11 = vector.shape_cast %10 : vector<2048xf32> to vector<1x2048xf32>
    %cst_6 = arith.constant 2.000000e+00 : f32
    %12 = vector.broadcast %cst_6 : f32 to vector<1x2048xf32>
    %13 = arith.divf %11, %12 : vector<1x2048xf32>
    %14 = vector.broadcast %6 : vector<1x2048xf32> to vector<2x2048xf32>
    %15 = arith.subf %2, %14 : vector<2x2048xf32>
    %cst_7 = arith.constant 9.99999974E-6 : f32
    %16 = vector.broadcast %cst_7 : f32 to vector<1x2048xf32>
    %17 = arith.addf %13, %16 : vector<1x2048xf32>
    %18 = math.rsqrt %17 : vector<1x2048xf32>
    %19 = vector.broadcast %18 : vector<1x2048xf32> to vector<2x2048xf32>
    %20 = arith.mulf %15, %19 : vector<2x2048xf32>
    %c0_8 = arith.constant 0 : index
    %c0_9 = arith.constant 0 : index
    %21 = vector.load %arg3[%c0_8, %c0_9] : memref<1x2048xf32, #tpu.memory_space<vmem>>, vector<1x2048xf32>
    %22 = vector.broadcast %21 : vector<1x2048xf32> to vector<2x2048xf32>
    %23 = arith.mulf %20, %22 : vector<2x2048xf32>
    %c0_10 = arith.constant 0 : index
    %c0_11 = arith.constant 0 : index
    %24 = vector.load %arg4[%c0_10, %c0_11] : memref<1x2048xf32, #tpu.memory_space<vmem>>, vector<1x2048xf32>
    %25 = vector.broadcast %24 : vector<1x2048xf32> to vector<2x2048xf32>
    %26 = arith.addf %23, %25 : vector<2x2048xf32>
    %cst_12 = arith.constant 0.000000e+00 : f32
    %27 = vector.broadcast %cst_12 : f32 to vector<2x2048xf32>
    %28 = arith.maximumf %26, %27 : vector<2x2048xf32>
    %c0_13 = arith.constant 0 : index
    %c0_14 = arith.constant 0 : index
    %29 = vector.load %arg5[%c0_13, %c0_14] : memref<2x2048xf32, #tpu.memory_space<vmem>>, vector<2x2048xf32>
    tpu.vector_store %arg5[%c0_13, %c0_14], %28 {strides = array<i32>} : memref<2x2048xf32, #tpu.memory_space<vmem>>, vector<2x2048xf32>,
    return
  }
  func.func @transform_0(%arg0: i32) -> (i32, i32) {
    %c0_i32 = arith.constant 0 : i32
    %c0_i32_0 = arith.constant 0 : i32
    %c0_i32_1 = arith.constant 0 : i32
    return %c0_i32, %c0_i32_0 : i32, i32
  }
  func.func @transform_1(%arg0: i32) -> (i32, i32) {
    %c0_i32 = arith.constant 0 : i32
    %c0_i32_0 = arith.constant 0 : i32
    %c0_i32_1 = arith.constant 0 : i32
    return %c0_i32, %c0_i32_0 : i32, i32
  }
  func.func @transform_2(%arg0: i32) -> (i32, i32) {
    %c0_i32 = arith.constant 0 : i32
    %c0_i32_0 = arith.constant 0 : i32
    %c0_i32_1 = arith.constant 0 : i32
    return %c0_i32, %c0_i32_0 : i32, i32
  }
  func.func @transform_3(%arg0: i32) -> (i32, i32) {
    %c0_i32 = arith.constant 0 : i32
    %c0_i32_0 = arith.constant 0 : i32
    %c0_i32_1 = arith.constant 0 : i32
    return %c0_i32, %c0_i32_0 : i32, i32
  }
  func.func @transform_4(%arg0: i32) -> (i32, i32) {
    %c0_i32 = arith.constant 0 : i32
    %c0_i32_0 = arith.constant 0 : i32
    %c0_i32_1 = arith.constant 0 : i32
    return %c0_i32, %c0_i32_0 : i32, i32
  }
}

</mosaic_0001>

<llo_original>
// kernel: tpu_custom_call.1
$region0: #{tpu_custom_call.1}
  #allocation0 [shape = 'u32[]', space=smem, size = 0x4, offset = 0x4, fixed_abs, tag = 'smem constant byte address 0x4 - core index']
  #allocation1 [shape = 'u32[144,128]{1,0:T(1,128)}', space=vmem, size = 0x12000, scoped, tag = 'internal scratch']
  %s0 = inlined_call_operand.hbm [shape: f32[2,32], index: 0, kind: input, shape index: {}]
  %s1 = inlined_call_operand.hbm [shape: f32[32,2048], index: 1, kind: input, shape index: {}]
  %s2 = inlined_call_operand.hbm [shape: f32[1,2048], index: 2, kind: input, shape index: {}]
  %s3 = inlined_call_operand.hbm [shape: f32[1,2048], index: 3, kind: input, shape index: {}]
  %s4 = inlined_call_operand.hbm [shape: f32[2,2048], index: 4, kind: output, shape index: {}]
  %s5 = sld [smem:[#allocation0]]
  $region42: #{tpu_custom_call.1} parent=0
    _
  %s7 = ssub.s32 1, %s5
  %s8 = scalar_select 0, %s7, %s5
  $region1: #{tpu_custom_call.1} parent=0
    #allocation2 [shape = 'u8[1024]{0}', space=vmem, size = 0x400, scoped, tag = 'input window, operand 0, single buffered']
    #allocation3 [shape = 's32[1]{0}', space=sflag, size = 0x4, scoped, tag = 'scoped memory for tpu_custom_call.1']
    #allocation4 [shape = 's32[1]{0}', space=sflag, size = 0x4, scoped, tag = 'scoped memory for tpu_custom_call.1']
    #allocation5 [shape = 'u8[262144]{0}', space=vmem, size = 0x40000, scoped, tag = 'input window, operand 1, single buffered']
    #allocation6 [shape = 's32[1]{0}', space=sflag, size = 0x4, scoped, tag = 'scoped memory for tpu_custom_call.1']
    #allocation7 [shape = 'u8[8192]{0}', space=vmem, size = 0x2000, scoped, tag = 'input window, operand 2, single buffered']
    #allocation8 [shape = 'u8[8192]{0}', space=vmem, size = 0x2000, scoped, tag = 'input window, operand 3, single buffered']
    #allocation9 [shape = 's32[1]{0}', space=sflag, size = 0x4, scoped, tag = 'scoped memory for tpu_custom_call.1']
    #allocation10 [shape = 'u8[16384]{0}', space=vmem, size = 0x4000, scoped, tag = 'output window, operand 0, single buffered']
    %9 = vsyncpa [#allocation3], 0
    %10 = vsyncpa [#allocation6], 0
    %11 = vsyncpa [#allocation9], 0
    %12 = vsyncpa [#allocation4], 0
    // Predicated region
    $region2: #{tpu_custom_call.1} parent=1 // pred_check
      _
    $region3: #{tpu_custom_call.1} parent=1 // pred_check_branch
      %14 = sbr.rel (0) target = $region5
    $region4: #{tpu_custom_call.1} parent=1 // pred_region
      %s16 = ssub.s32 32, 32
      %17 = vsyncadd [#allocation3], %s16
      %s19 = sshll.u32 [#allocation2], 4
      %s20 = int_to_ptr.vmem [resolvable:$true] %s19
      %22 = dma.hbm_to_vmem [thread:$0]  %s0, 32, %s20, [#allocation3]
    $region5: #{tpu_custom_call.1} parent=1 // pred_fallthru
      _
    // Predicated region
    $region6: #{tpu_custom_call.1} parent=1 // pred_check
      _
    $region7: #{tpu_custom_call.1} parent=1 // pred_check_branch
      %24 = sbr.rel (0) target = $region9
    $region8: #{tpu_custom_call.1} parent=1 // pred_region
      %s26 = ssub.s32 8192, 8192
      %27 = vsyncadd [#allocation6], %s26
      %s28 = sshll.u32 [#allocation5], 4
      %s29 = int_to_ptr.vmem [resolvable:$true] %s28
      %34 = dma.hbm_to_vmem [thread:$0]  %s1, 8192, %s29, [#allocation6], 2048, 2048, 128
    $region9: #{tpu_custom_call.1} parent=1 // pred_fallthru
      _
    // Predicated region
    $region10: #{tpu_custom_call.1} parent=1 // pred_check
      _
    $region11: #{tpu_custom_call.1} parent=1 // pred_check_branch
      %36 = sbr.rel (0) target = $region13
    $region12: #{tpu_custom_call.1} parent=1 // pred_region
      %s38 = ssub.s32 256, 256
      %39 = vsyncadd [#allocation6], %s38
      %s41 = sshll.u32 [#allocation7], 4
      %s42 = int_to_ptr.vmem [resolvable:$true] %s41
      %44 = dma.hbm_to_vmem [thread:$0]  %s2, 256, %s42, [#allocation6]
    $region13: #{tpu_custom_call.1} parent=1 // pred_fallthru
      _
    // Predicated region
    $region14: #{tpu_custom_call.1} parent=1 // pred_check
      _
    $region15: #{tpu_custom_call.1} parent=1 // pred_check_branch
      %46 = sbr.rel (0) target = $region17
    $region16: #{tpu_custom_call.1} parent=1 // pred_region
      %s48 = ssub.s32 256, 256
      %49 = vsyncadd [#allocation9], %s48
      %s51 = sshll.u32 [#allocation8], 4
      %s52 = int_to_ptr.vmem [resolvable:$true] %s51
      %54 = dma.hbm_to_vmem [thread:$0]  %s3, 256, %s52, [#allocation9]
    $region17: #{tpu_custom_call.1} parent=1 // pred_fallthru
      _
    // Predicated region
    $region18: #{tpu_custom_call.1} parent=1 // pred_check
      _
    $region19: #{tpu_custom_call.1} parent=1 // pred_check_branch
      %56 = sbr.rel (0) target = $region21
    $region20: #{tpu_custom_call.1} parent=1 // pred_region
      %57 = dma.done [#allocation3], 32
    $region21: #{tpu_custom_call.1} parent=1 // pred_fallthru
      _
    // Predicated region
    $region22: #{tpu_custom_call.1} parent=1 // pred_check
      _
    $region23: #{tpu_custom_call.1} parent=1 // pred_check_branch
      %59 = sbr.rel (0) target = $region25
    $region24: #{tpu_custom_call.1} parent=1 // pred_region
      %60 = dma.done [#allocation6], 8192
    $region25: #{tpu_custom_call.1} parent=1 // pred_fallthru
      _
    // Predicated region
    $region26: #{tpu_custom_call.1} parent=1 // pred_check
      _
    $region27: #{tpu_custom_call.1} parent=1 // pred_check_branch
      %62 = sbr.rel (0) target = $region29
    $region28: #{tpu_custom_call.1} parent=1 // pred_region
      %63 = dma.done [#allocation6], 256
    $region29: #{tpu_custom_call.1} parent=1 // pred_fallthru
      _
    // Predicated region
    $region30: #{tpu_custom_call.1} parent=1 // pred_check
      _
    $region31: #{tpu_custom_call.1} parent=1 // pred_check_branch
      %65 = sbr.rel (0) target = $region33
    $region32: #{tpu_custom_call.1} parent=1 // pred_region
      %66 = dma.done [#allocation9], 256
    $region33: #{tpu_custom_call.1} parent=1 // pred_fallthru
      _
    %v67 = vld [vmem:[#allocation2] sm:$0x3]
    %v68 = vld [vmem:[#allocation5] sm:$0xff]
    %v69 = vld [vmem:[#allocation5 + $0x8] sm:$0xff]
    %v70 = vld [vmem:[#allocation5 + $0x10] sm:$0xff]
    %v71 = vld [vmem:[#allocation5 + $0x18] sm:$0xff]
    %v72 = vld [vmem:[#allocation5 + $0x20] sm:$0xff]
    %v73 = vld [vmem:[#allocation5 + $0x28] sm:$0xff]
    %v74 = vld [vmem:[#allocation5 + $0x30] sm:$0xff]
    %v75 = vld [vmem:[#allocation5 + $0x38] sm:$0xff]
    %v76 = vld [vmem:[#allocation5 + $0x40] sm:$0xff]
    %v77 = vld [vmem:[#allocation5 + $0x48] sm:$0xff]
    %v78 = vld [vmem:[#allocation5 + $0x50] sm:$0xff]
    %v79 = vld [vmem:[#allocation5 + $0x58] sm:$0xff]
    %v80 = vld [vmem:[#allocation5 + $0x60] sm:$0xff]
    %v81 = vld [vmem:[#allocation5 + $0x68] sm:$0xff]
    %v82 = vld [vmem:[#allocation5 + $0x70] sm:$0xff]
    %v83 = vld [vmem:[#allocation5 + $0x78] sm:$0xff]
    %v84 = vld [vmem:[#allocation5 + $0x80] sm:$0xff]
    %v85 = vld [vmem:[#allocation5 + $0x88] sm:$0xff]
    %v86 = vld [vmem:[#allocation5 + $0x90] sm:$0xff]
    %v87 = vld [vmem:[#allocation5 + $0x98] sm:$0xff]
    %v88 = vld [vmem:[#allocation5 + $0xa0] sm:$0xff]
    %v89 = vld [vmem:[#allocation5 + $0xa8] sm:$0xff]
    %v90 = vld [vmem:[#allocation5 + $0xb0] sm:$0xff]
    %v91 = vld [vmem:[#allocation5 + $0xb8] sm:$0xff]
    %v92 = vld [vmem:[#allocation5 + $0xc0] sm:$0xff]
    %v93 = vld [vmem:[#allocation5 + $0xc8] sm:$0xff]
    %v94 = vld [vmem:[#allocation5 + $0xd0] sm:$0xff]
    %v95 = vld [vmem:[#allocation5 + $0xd8] sm:$0xff]
    %v96 = vld [vmem:[#allocation5 + $0xe0] sm:$0xff]
    %v97 = vld [vmem:[#allocation5 + $0xe8] sm:$0xff]
    %v98 = vld [vmem:[#allocation5 + $0xf0] sm:$0xff]
    %v99 = vld [vmem:[#allocation5 + $0xf8] sm:$0xff]
    %v100 = vld [vmem:[#allocation5 + $0x100] sm:$0xff]
    %v101 = vld [vmem:[#allocation5 + $0x108] sm:$0xff]
    %v102 = vld [vmem:[#allocation5 + $0x110] sm:$0xff]
    %v103 = vld [vmem:[#allocation5 + $0x118] sm:$0xff]
    %v104 = vld [vmem:[#allocation5 + $0x120] sm:$0xff]
    %v105 = vld [vmem:[#allocation5 + $0x128] sm:$0xff]
    %v106 = vld [vmem:[#allocation5 + $0x130] sm:$0xff]
    %v107 = vld [vmem:[#allocation5 + $0x138] sm:$0xff]
    %v108 = vld [vmem:[#allocation5 + $0x140] sm:$0xff]
    %v109 = vld [vmem:[#allocation5 + $0x148] sm:$0xff]
    %v110 = vld [vmem:[#allocation5 + $0x150] sm:$0xff]
    %v111 = vld [vmem:[#allocation5 + $0x158] sm:$0xff]
    %v112 = vld [vmem:[#allocation5 + $0x160] sm:$0xff]
    %v113 = vld [vmem:[#allocation5 + $0x168] sm:$0xff]
    %v114 = vld [vmem:[#allocation5 + $0x170] sm:$0xff]
    %v115 = vld [vmem:[#allocation5 + $0x178] sm:$0xff]
    %v116 = vld [vmem:[#allocation5 + $0x180] sm:$0xff]
    %v117 = vld [vmem:[#allocation5 + $0x188] sm:$0xff]
    %v118 = vld [vmem:[#allocation5 + $0x190] sm:$0xff]
    %v119 = vld [vmem:[#allocation5 + $0x198] sm:$0xff]
    %v120 = vld [vmem:[#allocation5 + $0x1a0] sm:$0xff]
    %v121 = vld [vmem:[#allocation5 + $0x1a8] sm:$0xff]
    %v122 = vld [vmem:[#allocation5 + $0x1b0] sm:$0xff]
    %v123 = vld [vmem:[#allocation5 + $0x1b8] sm:$0xff]
    %v124 = vld [vmem:[#allocation5 + $0x1c0] sm:$0xff]
    %v125 = vld [vmem:[#allocation5 + $0x1c8] sm:$0xff]
    %v126 = vld [vmem:[#allocation5 + $0x1d0] sm:$0xff]
    %v127 = vld [vmem:[#allocation5 + $0x1d8] sm:$0xff]
    %v128 = vld [vmem:[#allocation5 + $0x1e0] sm:$0xff]
    %v129 = vld [vmem:[#allocation5 + $0x1e8] sm:$0xff]
    %v130 = vld [vmem:[#allocation5 + $0x1f0] sm:$0xff]
    %v131 = vld [vmem:[#allocation5 + $0x1f8] sm:$0xff]
    %vm132 = vcmask 261120
    %v134 = vsel %vm132, %v67, 0
    %136 = vmatprep.subr.mxu0 %v69
    %137 = vmatpush1.msra.mxu0 %v68
    %138 = vmatprep.subr.mxu0 %v85
    %139 = vmatpush1.msra.mxu0 %v84
    %140 = vmatprep.subr.mxu0 %v101
    %141 = vmatpush1.msra.mxu0 %v100
    %142 = vmatprep.subr.mxu0 %v117
    %143 = vmatpush1.msra.mxu0 %v116
    %144 = vmatprep.subr.mxu0 0.0
    %145 = vmatpush1.msra.mxu0 0.0
    %146 = vmatprep.subr.mxu0 0.0
    %147 = vmatpush1.msra.mxu0 0.0
    %148 = vmatprep.subr.mxu0 0.0
    %149 = vmatpush1.msra.mxu0 0.0
    %150 = vmatprep.subr.mxu0 0.0
    %151 = vmatpush1.msra.mxu0 0.0
    %152 = vmatprep.subr.mxu0 0.0
    %153 = vmatpush1.msra.mxu0 0.0
    %154 = vmatprep.subr.mxu0 0.0
    %155 = vmatpush1.msra.mxu0 0.0
    %156 = vmatprep.subr.mxu0 0.0
    %157 = vmatpush1.msra.mxu0 0.0
    %158 = vmatprep.subr.mxu0 0.0
    %159 = vmatpush1.msra.mxu0 0.0
    %160 = vmatprep.subr.mxu0 0.0
    %161 = vmatpush1.msra.mxu0 0.0
    %162 = vmatprep.subr.mxu0 0.0
    %163 = vmatpush1.msra.mxu0 0.0
    %164 = vmatprep.subr.mxu0 0.0
    %165 = vmatpush1.msra.mxu0 0.0
    %166 = vmatprep.subr.mxu0 0.0
    %167 = vmatpush1.msra.mxu0 0.0
    %168 = vmatprep.subr.mxu0 0.0
    %169 = vmatpush1.msra.mxu0 0.0
    %170 = vmatprep.subr.mxu0 0.0
    %171 = vmatpush1.msra.mxu0 0.0
    %172 = vmatprep.subr.mxu0 0.0
    %173 = vmatpush1.msra.mxu0 0.0
    %174 = vmatprep.subr.mxu0 0.0
    %175 = vmatpush1.msra.mxu0 0.0
    %176 = vmatprep.subr.mxu0 0.0
    %177 = vmatpush1.msra.mxu0 0.0
    %178 = vmatprep.subr.mxu0 0.0
    %179 = vmatpush1.msra.mxu0 0.0
    %180 = vmatprep.subr.mxu0 0.0
    %181 = vmatpush1.msra.mxu0 0.0
    %182 = vmatprep.subr.mxu0 0.0
    %183 = vmatpush1.msra.mxu0 0.0
    %184 = vmatprep.subr.mxu0 0.0
    %185 = vmatpush1.msra.mxu0 0.0
    %186 = vmatprep.subr.mxu0 0.0
    %187 = vmatpush1.msra.mxu0 0.0
    %188 = vmatprep.subr.mxu0 0.0
    %189 = vmatpush1.msra.mxu0 0.0
    %190 = vmatprep.subr.mxu0 0.0
    %191 = vmatpush1.msra.mxu0 0.0
    %192 = vmatprep.subr.mxu0 0.0
    %193 = vmatpush1.msra.mxu0 0.0
    %194 = vmatprep.subr.mxu0 0.0
    %195 = vmatpush1.msra.mxu0 0.0
    %196 = vmatprep.subr.mxu0 0.0
    %197 = vmatpush1.msra.mxu0 0.0
    %198 = vmatprep.subr.mxu0 0.0
    %199 = vmatpush1.msra.mxu0 0.0
    %200 = vmatprep.mubr.f32.mxu0 0.0
    %201 = vmatmul.mubr.f32.gmra.mrb[0].mxu0 %v134
    %v202 = vpop.f32.mrb[0].mxu0
    %v203 = vadd.f32 0.0, %v202
    %v204 = vpop.f32.mrb[0].mxu0
    %v205 = vadd.f32 0.0, %v204
    %206 = vdwg.mxu0
    %207 = vmatprep.subr.mxu0 %v71
    %208 = vmatpush1.msra.mxu0 %v70
    %209 = vmatprep.subr.mxu0 %v87
    %210 = vmatpush1.msra.mxu0 %v86
    %211 = vmatprep.subr.mxu0 %v103
    %212 = vmatpush1.msra.mxu0 %v102
    %213 = vmatprep.subr.mxu0 %v119
    %214 = vmatpush1.msra.mxu0 %v118
    %215 = vmatprep.subr.mxu0 0.0
    %216 = vmatpush1.msra.mxu0 0.0
    %217 = vmatprep.subr.mxu0 0.0
    %218 = vmatpush1.msra.mxu0 0.0
    %219 = vmatprep.subr.mxu0 0.0
    %220 = vmatpush1.msra.mxu0 0.0
    %221 = vmatprep.subr.mxu0 0.0
    %222 = vmatpush1.msra.mxu0 0.0
    %223 = vmatprep.subr.mxu0 0.0
    %224 = vmatpush1.msra.mxu0 0.0
    %225 = vmatprep.subr.mxu0 0.0
    %226 = vmatpush1.msra.mxu0 0.0
    %227 = vmatprep.subr.mxu0 0.0
    %228 = vmatpush1.msra.mxu0 0.0
    %229 = vmatprep.subr.mxu0 0.0
    %230 = vmatpush1.msra.mxu0 0.0
    %231 = vmatprep.subr.mxu0 0.0
    %232 = vmatpush1.msra.mxu0 0.0
    %233 = vmatprep.subr.mxu0 0.0
    %234 = vmatpush1.msra.mxu0 0.0
    %235 = vmatprep.subr.mxu0 0.0
    %236 = vmatpush1.msra.mxu0 0.0
    %237 = vmatprep.subr.mxu0 0.0
    %238 = vmatpush1.msra.mxu0 0.0
    %239 = vmatprep.subr.mxu0 0.0
    %240 = vmatpush1.msra.mxu0 0.0
    %241 = vmatprep.subr.mxu0 0.0
    %242 = vmatpush1.msra.mxu0 0.0
    %243 = vmatprep.subr.mxu0 0.0
    %244 = vmatpush1.msra.mxu0 0.0
    %245 = vmatprep.subr.mxu0 0.0
    %246 = vmatpush1.msra.mxu0 0.0
    %247 = vmatprep.subr.mxu0 0.0
    %248 = vmatpush1.msra.mxu0 0.0
    %249 = vmatprep.subr.mxu0 0.0
    %250 = vmatpush1.msra.mxu0 0.0
    %251 = vmatprep.subr.mxu0 0.0
    %252 = vmatpush1.msra.mxu0 0.0
    %253 = vmatprep.subr.mxu0 0.0
    %254 = vmatpush1.msra.mxu0 0.0
    %255 = vmatprep.subr.mxu0 0.0
    %256 = vmatpush1.msra.mxu0 0.0
    %257 = vmatprep.subr.mxu0 0.0
    %258 = vmatpush1.msra.mxu0 0.0
    %259 = vmatprep.subr.mxu0 0.0
    %260 = vmatpush1.msra.mxu0 0.0
    %261 = vmatprep.subr.mxu0 0.0
    %262 = vmatpush1.msra.mxu0 0.0
    %263 = vmatprep.subr.mxu0 0.0
    %264 = vmatpush1.msra.mxu0 0.0
    %265 = vmatprep.subr.mxu0 0.0
    %266 = vmatpush1.msra.mxu0 0.0
    %267 = vmatprep.subr.mxu0 0.0
    %268 = vmatpush1.msra.mxu0 0.0
    %269 = vmatprep.subr.mxu0 0.0
    %270 = vmatpush1.msra.mxu0 0.0
    %271 = vmatprep.mubr.f32.mxu0 0.0
    %272 = vmatmul.mubr.f32.gmra.mrb[0].mxu0 %v134
    %v273 = vpop.f32.mrb[0].mxu0
    %v274 = vadd.f32 0.0, %v273
    %v275 = vpop.f32.mrb[0].mxu0
    %v276 = vadd.f32 0.0, %v275
    %277 = vdwg.mxu0
    %278 = vmatprep.subr.mxu0 %v73
    %279 = vmatpush1.msra.mxu0 %v72
    %280 = vmatprep.subr.mxu0 %v89
    %281 = vmatpush1.msra.mxu0 %v88
    %282 = vmatprep.subr.mxu0 %v105
    %283 = vmatpush1.msra.mxu0 %v104
    %284 = vmatprep.subr.mxu0 %v121
    %285 = vmatpush1.msra.mxu0 %v120
    %286 = vmatprep.subr.mxu0 0.0
    %287 = vmatpush1.msra.mxu0 0.0
    %288 = vmatprep.subr.mxu0 0.0
    %289 = vmatpush1.msra.mxu0 0.0
    %290 = vmatprep.subr.mxu0 0.0
    %291 = vmatpush1.msra.mxu0 0.0
    %292 = vmatprep.subr.mxu0 0.0
    %293 = vmatpush1.msra.mxu0 0.0
    %294 = vmatprep.subr.mxu0 0.0
    %295 = vmatpush1.msra.mxu0 0.0
    %296 = vmatprep.subr.mxu0 0.0
    %297 = vmatpush1.msra.mxu0 0.0
    %298 = vmatprep.subr.mxu0 0.0
    %299 = vmatpush1.msra.mxu0 0.0
    %300 = vmatprep.subr.mxu0 0.0
    %301 = vmatpush1.msra.mxu0 0.0
    %302 = vmatprep.subr.mxu0 0.0
    %303 = vmatpush1.msra.mxu0 0.0
    %304 = vmatprep.subr.mxu0 0.0
    %305 = vmatpush1.msra.mxu0 0.0
    %306 = vmatprep.subr.mxu0 0.0
    %307 = vmatpush1.msra.mxu0 0.0
    %308 = vmatprep.subr.mxu0 0.0
    %309 = vmatpush1.msra.mxu0 0.0
    %310 = vmatprep.subr.mxu0 0.0
    %311 = vmatpush1.msra.mxu0 0.0
    %312 = vmatprep.subr.mxu0 0.0
    %313 = vmatpush1.msra.mxu0 0.0
    %314 = vmatprep.subr.mxu0 0.0
    %315 = vmatpush1.msra.mxu0 0.0
    %316 = vmatprep.subr.mxu0 0.0
    %317 = vmatpush1.msra.mxu0 0.0
    %318 = vmatprep.subr.mxu0 0.0
    %319 = vmatpush1.msra.mxu0 0.0
    %320 = vmatprep.subr.mxu0 0.0
    %321 = vmatpush1.msra.mxu0 0.0
    %322 = vmatprep.subr.mxu0 0.0
    %323 = vmatpush1.msra.mxu0 0.0
    %324 = vmatprep.subr.mxu0 0.0
    %325 = vmatpush1.msra.mxu0 0.0
    %326 = vmatprep.subr.mxu0 0.0
    %327 = vmatpush1.msra.mxu0 0.0
    %328 = vmatprep.subr.mxu0 0.0
    %329 = vmatpush1.msra.mxu0 0.0
    %330 = vmatprep.subr.mxu0 0.0
    %331 = vmatpush1.msra.mxu0 0.0
    %332 = vmatprep.subr.mxu0 0.0
    %333 = vmatpush1.msra.mxu0 0.0
    %334 = vmatprep.subr.mxu0 0.0
    %335 = vmatpush1.msra.mxu0 0.0
    %336 = vmatprep.subr.mxu0 0.0
    %337 = vmatpush1.msra.mxu0 0.0
    %338 = vmatprep.subr.mxu0 0.0
    %339 = vmatpush1.msra.mxu0 0.0
    %340 = vmatprep.subr.mxu0 0.0
    %341 = vmatpush1.msra.mxu0 0.0
    %342 = vmatprep.mubr.f32.mxu0 0.0
    %343 = vmatmul.mubr.f32.gmra.mrb[0].mxu0 %v134
    %v344 = vpop.f32.mrb[0].mxu0
    %v345 = vadd.f32 0.0, %v344
    %v346 = vpop.f32.mrb[0].mxu0
    %v347 = vadd.f32 0.0, %v346
    %348 = vdwg.mxu0
    %349 = vmatprep.subr.mxu0 %v75
    %350 = vmatpush1.msra.mxu0 %v74
    %351 = vmatprep.subr.mxu0 %v91
    %352 = vmatpush1.msra.mxu0 %v90
    %353 = vmatprep.subr.mxu0 %v107
    %354 = vmatpush1.msra.mxu0 %v106
    %355 = vmatprep.subr.mxu0 %v123
    %356 = vmatpush1.msra.mxu0 %v122
    %357 = vmatprep.subr.mxu0 0.0
    %358 = vmatpush1.msra.mxu0 0.0
    %359 = vmatprep.subr.mxu0 0.0
    %360 = vmatpush1.msra.mxu0 0.0
    %361 = vmatprep.subr.mxu0 0.0
    %362 = vmatpush1.msra.mxu0 0.0
    %363 = vmatprep.subr.mxu0 0.0
    %364 = vmatpush1.msra.mxu0 0.0
    %365 = vmatprep.subr.mxu0 0.0
    %366 = vmatpush1.msra.mxu0 0.0
    %367 = vmatprep.subr.mxu0 0.0
    %368 = vmatpush1.msra.mxu0 0.0
    %369 = vmatprep.subr.mxu0 0.0
    %370 = vmatpush1.msra.mxu0 0.0
    %371 = vmatprep.subr.mxu0 0.0
    %372 = vmatpush1.msra.mxu0 0.0
    %373 = vmatprep.subr.mxu0 0.0
    %374 = vmatpush1.msra.mxu0 0.0
    %375 = vmatprep.subr.mxu0 0.0
    %376 = vmatpush1.msra.mxu0 0.0
    %377 = vmatprep.subr.mxu0 0.0
    %378 = vmatpush1.msra.mxu0 0.0
    %379 = vmatprep.subr.mxu0 0.0
    %380 = vmatpush1.msra.mxu0 0.0
    %381 = vmatprep.subr.mxu0 0.0
    %382 = vmatpush1.msra.mxu0 0.0
    %383 = vmatprep.subr.mxu0 0.0
    %384 = vmatpush1.msra.mxu0 0.0
    %385 = vmatprep.subr.mxu0 0.0
    %386 = vmatpush1.msra.mxu0 0.0
    %387 = vmatprep.subr.mxu0 0.0
    %388 = vmatpush1.msra.mxu0 0.0
    %389 = vmatprep.subr.mxu0 0.0
    %390 = vmatpush1.msra.mxu0 0.0
    %391 = vmatprep.subr.mxu0 0.0
    %392 = vmatpush1.msra.mxu0 0.0
    %393 = vmatprep.subr.mxu0 0.0
    %394 = vmatpush1.msra.mxu0 0.0
    %395 = vmatprep.subr.mxu0 0.0
    %396 = vmatpush1.msra.mxu0 0.0
    %397 = vmatprep.subr.mxu0 0.0
    %398 = vmatpush1.msra.mxu0 0.0
    %399 = vmatprep.subr.mxu0 0.0
    %400 = vmatpush1.msra.mxu0 0.0
    %401 = vmatprep.subr.mxu0 0.0
    %402 = vmatpush1.msra.mxu0 0.0
    %403 = vmatprep.subr.mxu0 0.0
    %404 = vmatpush1.msra.mxu0 0.0
    %405 = vmatprep.subr.mxu0 0.0
    %406 = vmatpush1.msra.mxu0 0.0
    %407 = vmatprep.subr.mxu0 0.0
    %408 = vmatpush1.msra.mxu0 0.0
    %409 = vmatprep.subr.mxu0 0.0
    %410 = vmatpush1.msra.mxu0 0.0
    %411 = vmatprep.subr.mxu0 0.0
    %412 = vmatpush1.msra.mxu0 0.0
    %413 = vmatprep.mubr.f32.mxu0 0.0
    %414 = vmatmul.mubr.f32.gmra.mrb[0].mxu0 %v134
    %v415 = vpop.f32.mrb[0].mxu0
    %v416 = vadd.f32 0.0, %v415
    %v417 = vpop.f32.mrb[0].mxu0
    %v418 = vadd.f32 0.0, %v417
    %419 = vdwg.mxu0
    %420 = vmatprep.subr.mxu0 %v77
    %421 = vmatpush1.msra.mxu0 %v76
    %422 = vmatprep.subr.mxu0 %v93
    %423 = vmatpush1.msra.mxu0 %v92
    %424 = vmatprep.subr.mxu0 %v109
    %425 = vmatpush1.msra.mxu0 %v108
    %426 = vmatprep.subr.mxu0 %v125
    %427 = vmatpush1.msra.mxu0 %v124
    %428 = vmatprep.subr.mxu0 0.0
    %429 = vmatpush1.msra.mxu0 0.0
    %430 = vmatprep.subr.mxu0 0.0
    %431 = vmatpush1.msra.mxu0 0.0
    %432 = vmatprep.subr.mxu0 0.0
    %433 = vmatpush1.msra.mxu0 0.0
    %434 = vmatprep.subr.mxu0 0.0
    %435 = vmatpush1.msra.mxu0 0.0
    %436 = vmatprep.subr.mxu0 0.0
    %437 = vmatpush1.msra.mxu0 0.0
    %438 = vmatprep.subr.mxu0 0.0
    %439 = vmatpush1.msra.mxu0 0.0
    %440 = vmatprep.subr.mxu0 0.0
    %441 = vmatpush1.msra.mxu0 0.0
    %442 = vmatprep.subr.mxu0 0.0
    %443 = vmatpush1.msra.mxu0 0.0
    %444 = vmatprep.subr.mxu0 0.0
    %445 = vmatpush1.msra.mxu0 0.0
    %446 = vmatprep.subr.mxu0 0.0
    %447 = vmatpush1.msra.mxu0 0.0
    %448 = vmatprep.subr.mxu0 0.0
    %449 = vmatpush1.msra.mxu0 0.0
    %450 = vmatprep.subr.mxu0 0.0
    %451 = vmatpush1.msra.mxu0 0.0
    %452 = vmatprep.subr.mxu0 0.0
    %453 = vmatpush1.msra.mxu0 0.0
    %454 = vmatprep.subr.mxu0 0.0
    %455 = vmatpush1.msra.mxu0 0.0
    %456 = vmatprep.subr.mxu0 0.0
    %457 = vmatpush1.msra.mxu0 0.0
    %458 = vmatprep.subr.mxu0 0.0
    %459 = vmatpush1.msra.mxu0 0.0
    %460 = vmatprep.subr.mxu0 0.0
    %461 = vmatpush1.msra.mxu0 0.0
    %462 = vmatprep.subr.mxu0 0.0
    %463 = vmatpush1.msra.mxu0 0.0
    %464 = vmatprep.subr.mxu0 0.0
    %465 = vmatpush1.msra.mxu0 0.0
    %466 = vmatprep.subr.mxu0 0.0
    %467 = vmatpush1.msra.mxu0 0.0
    %468 = vmatprep.subr.mxu0 0.0
    %469 = vmatpush1.msra.mxu0 0.0
    %470 = vmatprep.subr.mxu0 0.0
    %471 = vmatpush1.msra.mxu0 0.0
    %472 = vmatprep.subr.mxu0 0.0
    %473 = vmatpush1.msra.mxu0 0.0
    %474 = vmatprep.subr.mxu0 0.0
    %475 = vmatpush1.msra.mxu0 0.0
    %476 = vmatprep.subr.mxu0 0.0
    %477 = vmatpush1.msra.mxu0 0.0
    %478 = vmatprep.subr.mxu0 0.0
    %479 = vmatpush1.msra.mxu0 0.0
    %480 = vmatprep.subr.mxu0 0.0
    %481 = vmatpush1.msra.mxu0 0.0
    %482 = vmatprep.subr.mxu0 0.0
    %483 = vmatpush1.msra.mxu0 0.0
    %484 = vmatprep.mubr.f32.mxu0 0.0
    %485 = vmatmul.mubr.f32.gmra.mrb[0].mxu0 %v134
    %v486 = vpop.f32.mrb[0].mxu0
    %v487 = vadd.f32 0.0, %v486
    %v488 = vpop.f32.mrb[0].mxu0
    %v489 = vadd.f32 0.0, %v488
    %490 = vdwg.mxu0
    %491 = vmatprep.subr.mxu0 %v79
    %492 = vmatpush1.msra.mxu0 %v78
    %493 = vmatprep.subr.mxu0 %v95
    %494 = vmatpush1.msra.mxu0 %v94
    %495 = vmatprep.subr.mxu0 %v111
    %496 = vmatpush1.msra.mxu0 %v110
    %497 = vmatprep.subr.mxu0 %v127
    %498 = vmatpush1.msra.mxu0 %v126
    %499 = vmatprep.subr.mxu0 0.0
    %500 = vmatpush1.msra.mxu0 0.0
    %501 = vmatprep.subr.mxu0 0.0
    %502 = vmatpush1.msra.mxu0 0.0
    %503 = vmatprep.subr.mxu0 0.0
    %504 = vmatpush1.msra.mxu0 0.0
    %505 = vmatprep.subr.mxu0 0.0
    %506 = vmatpush1.msra.mxu0 0.0
    %507 = vmatprep.subr.mxu0 0.0
    %508 = vmatpush1.msra.mxu0 0.0
    %509 = vmatprep.subr.mxu0 0.0
    %510 = vmatpush1.msra.mxu0 0.0
    %511 = vmatprep.subr.mxu0 0.0
    %512 = vmatpush1.msra.mxu0 0.0
    %513 = vmatprep.subr.mxu0 0.0
    %514 = vmatpush1.msra.mxu0 0.0
    %515 = vmatprep.subr.mxu0 0.0
    %516 = vmatpush1.msra.mxu0 0.0
    %517 = vmatprep.subr.mxu0 0.0
    %518 = vmatpush1.msra.mxu0 0.0
    %519 = vmatprep.subr.mxu0 0.0
    %520 = vmatpush1.msra.mxu0 0.0
    %521 = vmatprep.subr.mxu0 0.0
    %522 = vmatpush1.msra.mxu0 0.0
    %523 = vmatprep.subr.mxu0 0.0
    %524 = vmatpush1.msra.mxu0 0.0
    %525 = vmatprep.subr.mxu0 0.0
    %526 = vmatpush1.msra.mxu0 0.0
    %527 = vmatprep.subr.mxu0 0.0
    %528 = vmatpush1.msra.mxu0 0.0
    %529 = vmatprep.subr.mxu0 0.0
    %530 = vmatpush1.msra.mxu0 0.0
    %531 = vmatprep.subr.mxu0 0.0
    %532 = vmatpush1.msra.mxu0 0.0
    %533 = vmatprep.subr.mxu0 0.0
    %534 = vmatpush1.msra.mxu0 0.0
    %535 = vmatprep.subr.mxu0 0.0
    %536 = vmatpush1.msra.mxu0 0.0
    %537 = vmatprep.subr.mxu0 0.0
    %538 = vmatpush1.msra.mxu0 0.0
    %539 = vmatprep.subr.mxu0 0.0
    %540 = vmatpush1.msra.mxu0 0.0
    %541 = vmatprep.subr.mxu0 0.0
    %542 = vmatpush1.msra.mxu0 0.0
    %543 = vmatprep.subr.mxu0 0.0
    %544 = vmatpush1.msra.mxu0 0.0
    %545 = vmatprep.subr.mxu0 0.0
    %546 = vmatpush1.msra.mxu0 0.0
    %547 = vmatprep.subr.mxu0 0.0
    %548 = vmatpush1.msra.mxu0 0.0
    %549 = vmatprep.subr.mxu0 0.0
    %550 = vmatpush1.msra.mxu0 0.0
    %551 = vmatprep.subr.mxu0 0.0
    %552 = vmatpush1.msra.mxu0 0.0
    %553 = vmatprep.subr.mxu0 0.0
    %554 = vmatpush1.msra.mxu0 0.0
    %555 = vmatprep.mubr.f32.mxu0 0.0
    %556 = vmatmul.mubr.f32.gmra.mrb[0].mxu0 %v134
    %v557 = vpop.f32.mrb[0].mxu0
    %v558 = vadd.f32 0.0, %v557
    %v559 = vpop.f32.mrb[0].mxu0
    %v560 = vadd.f32 0.0, %v559
    %561 = vdwg.mxu0
    %562 = vmatprep.subr.mxu0 %v81
    %563 = vmatpush1.msra.mxu0 %v80
    %564 = vmatprep.subr.mxu0 %v97
    %565 = vmatpush1.msra.mxu0 %v96
    %566 = vmatprep.subr.mxu0 %v113
    %567 = vmatpush1.msra.mxu0 %v112
    %568 = vmatprep.subr.mxu0 %v129
    %569 = vmatpush1.msra.mxu0 %v128
    %570 = vmatprep.subr.mxu0 0.0
    %571 = vmatpush1.msra.mxu0 0.0
    %572 = vmatprep.subr.mxu0 0.0
    %573 = vmatpush1.msra.mxu0 0.0
    %574 = vmatprep.subr.mxu0 0.0
    %575 = vmatpush1.msra.mxu0 0.0
    %576 = vmatprep.subr.mxu0 0.0
    %577 = vmatpush1.msra.mxu0 0.0
    %578 = vmatprep.subr.mxu0 0.0
    %579 = vmatpush1.msra.mxu0 0.0
    %580 = vmatprep.subr.mxu0 0.0
    %581 = vmatpush1.msra.mxu0 0.0
    %582 = vmatprep.subr.mxu0 0.0
    %583 = vmatpush1.msra.mxu0 0.0
    %584 = vmatprep.subr.mxu0 0.0
    %585 = vmatpush1.msra.mxu0 0.0
    %586 = vmatprep.subr.mxu0 0.0
    %587 = vmatpush1.msra.mxu0 0.0
    %588 = vmatprep.subr.mxu0 0.0
    %589 = vmatpush1.msra.mxu0 0.0
    %590 = vmatprep.subr.mxu0 0.0
    %591 = vmatpush1.msra.mxu0 0.0
    %592 = vmatprep.subr.mxu0 0.0
    %593 = vmatpush1.msra.mxu0 0.0
    %594 = vmatprep.subr.mxu0 0.0
    %595 = vmatpush1.msra.mxu0 0.0
    %596 = vmatprep.subr.mxu0 0.0
    %597 = vmatpush1.msra.mxu0 0.0
    %598 = vmatprep.subr.mxu0 0.0
    %599 = vmatpush1.msra.mxu0 0.0
    %600 = vmatprep.subr.mxu0 0.0
    %601 = vmatpush1.msra.mxu0 0.0
    %602 = vmatprep.subr.mxu0 0.0
    %603 = vmatpush1.msra.mxu0 0.0
    %604 = vmatprep.subr.mxu0 0.0
    %605 = vmatpush1.msra.mxu0 0.0
    %606 = vmatprep.subr.mxu0 0.0
    %607 = vmatpush1.msra.mxu0 0.0
    %608 = vmatprep.subr.mxu0 0.0
    %609 = vmatpush1.msra.mxu0 0.0
    %610 = vmatprep.subr.mxu0 0.0
    %611 = vmatpush1.msra.mxu0 0.0
    %612 = vmatprep.subr.mxu0 0.0
    %613 = vmatpush1.msra.mxu0 0.0
    %614 = vmatprep.subr.mxu0 0.0
    %615 = vmatpush1.msra.mxu0 0.0
    %616 = vmatprep.subr.mxu0 0.0
    %617 = vmatpush1.msra.mxu0 0.0
    %618 = vmatprep.subr.mxu0 0.0
    %619 = vmatpush1.msra.mxu0 0.0
    %620 = vmatprep.subr.mxu0 0.0
    %621 = vmatpush1.msra.mxu0 0.0
    %622 = vmatprep.subr.mxu0 0.0
    %623 = vmatpush1.msra.mxu0 0.0
    %624 = vmatprep.subr.mxu0 0.0
    %625 = vmatpush1.msra.mxu0 0.0
    %626 = vmatprep.mubr.f32.mxu0 0.0
    %627 = vmatmul.mubr.f32.gmra.mrb[0].mxu0 %v134
    %v628 = vpop.f32.mrb[0].mxu0
    %v629 = vadd.f32 0.0, %v628
    %v630 = vpop.f32.mrb[0].mxu0
    %v631 = vadd.f32 0.0, %v630
    %632 = vdwg.mxu0
    %633 = vmatprep.subr.mxu0 %v83
    %634 = vmatpush1.msra.mxu0 %v82
    %635 = vmatprep.subr.mxu0 %v99
    %636 = vmatpush1.msra.mxu0 %v98
    %637 = vmatprep.subr.mxu0 %v115
    %638 = vmatpush1.msra.mxu0 %v114
    %639 = vmatprep.subr.mxu0 %v131
    %640 = vmatpush1.msra.mxu0 %v130
    %641 = vmatprep.subr.mxu0 0.0
    %642 = vmatpush1.msra.mxu0 0.0
    %643 = vmatprep.subr.mxu0 0.0
    %644 = vmatpush1.msra.mxu0 0.0
    %645 = vmatprep.subr.mxu0 0.0
    %646 = vmatpush1.msra.mxu0 0.0
    %647 = vmatprep.subr.mxu0 0.0
    %648 = vmatpush1.msra.mxu0 0.0
    %649 = vmatprep.subr.mxu0 0.0
    %650 = vmatpush1.msra.mxu0 0.0
    %651 = vmatprep.subr.mxu0 0.0
    %652 = vmatpush1.msra.mxu0 0.0
    %653 = vmatprep.subr.mxu0 0.0
    %654 = vmatpush1.msra.mxu0 0.0
    %655 = vmatprep.subr.mxu0 0.0
    %656 = vmatpush1.msra.mxu0 0.0
    %657 = vmatprep.subr.mxu0 0.0
    %658 = vmatpush1.msra.mxu0 0.0
    %659 = vmatprep.subr.mxu0 0.0
    %660 = vmatpush1.msra.mxu0 0.0
    %661 = vmatprep.subr.mxu0 0.0
    %662 = vmatpush1.msra.mxu0 0.0
    %663 = vmatprep.subr.mxu0 0.0
    %664 = vmatpush1.msra.mxu0 0.0
    %665 = vmatprep.subr.mxu0 0.0
    %666 = vmatpush1.msra.mxu0 0.0
    %667 = vmatprep.subr.mxu0 0.0
    %668 = vmatpush1.msra.mxu0 0.0
    %669 = vmatprep.subr.mxu0 0.0
    %670 = vmatpush1.msra.mxu0 0.0
    %671 = vmatprep.subr.mxu0 0.0
    %672 = vmatpush1.msra.mxu0 0.0
    %673 = vmatprep.subr.mxu0 0.0
    %674 = vmatpush1.msra.mxu0 0.0
    %675 = vmatprep.subr.mxu0 0.0
    %676 = vmatpush1.msra.mxu0 0.0
    %677 = vmatprep.subr.mxu0 0.0
    %678 = vmatpush1.msra.mxu0 0.0
    %679 = vmatprep.subr.mxu0 0.0
    %680 = vmatpush1.msra.mxu0 0.0
    %681 = vmatprep.subr.mxu0 0.0
    %682 = vmatpush1.msra.mxu0 0.0
    %683 = vmatprep.subr.mxu0 0.0
    %684 = vmatpush1.msra.mxu0 0.0
    %685 = vmatprep.subr.mxu0 0.0
    %686 = vmatpush1.msra.mxu0 0.0
    %687 = vmatprep.subr.mxu0 0.0
    %688 = vmatpush1.msra.mxu0 0.0
    %689 = vmatprep.subr.mxu0 0.0
    %690 = vmatpush1.msra.mxu0 0.0
    %691 = vmatprep.subr.mxu0 0.0
    %692 = vmatpush1.msra.mxu0 0.0
    %693 = vmatprep.subr.mxu0 0.0
    %694 = vmatpush1.msra.mxu0 0.0
    %695 = vmatprep.subr.mxu0 0.0
    %696 = vmatpush1.msra.mxu0 0.0
    %697 = vmatprep.mubr.f32.mxu0 0.0
    %698 = vmatmul.mubr.f32.gmra.mrb[0].mxu0 %v134
    %v699 = vpop.f32.mrb[0].mxu0
    %v700 = vadd.f32 0.0, %v699
    %v701 = vpop.f32.mrb[0].mxu0
    %v702 = vadd.f32 0.0, %v701
    %703 = vdwg.mxu0
    %vm704 = vcmask 1041408
    %v705 = vsel %vm704, %v203, 0.0
    %v706 = vrot.slane %v705, 4
    %v707 = vadd.f32 %v705, %v706
    %v708 = vrot.slane %v707, 2
    %v709 = vadd.f32 %v707, %v708
    %v710 = vrot.slane %v709, 1
    %v711 = vadd.f32 %v709, %v710
    %v712 = vsel %vm704, %v205, 0.0
    %v713 = vrot.slane %v712, 4
    %v714 = vadd.f32 %v712, %v713
    %v715 = vrot.slane %v714, 2
    %v716 = vadd.f32 %v714, %v715
    %v717 = vrot.slane %v716, 1
    %v718 = vadd.f32 %v716, %v717
    %v719 = vsel %vm704, %v274, 0.0
    %v720 = vrot.slane %v719, 4
    %v721 = vadd.f32 %v719, %v720
    %v722 = vrot.slane %v721, 2
    %v723 = vadd.f32 %v721, %v722
    %v724 = vrot.slane %v723, 1
    %v725 = vadd.f32 %v723, %v724
    %v726 = vsel %vm704, %v276, 0.0
    %v727 = vrot.slane %v726, 4
    %v728 = vadd.f32 %v726, %v727
    %v729 = vrot.slane %v728, 2
    %v730 = vadd.f32 %v728, %v729
    %v731 = vrot.slane %v730, 1
    %v732 = vadd.f32 %v730, %v731
    %v733 = vsel %vm704, %v345, 0.0
    %v734 = vrot.slane %v733, 4
    %v735 = vadd.f32 %v733, %v734
    %v736 = vrot.slane %v735, 2
    %v737 = vadd.f32 %v735, %v736
    %v738 = vrot.slane %v737, 1
    %v739 = vadd.f32 %v737, %v738
    %v740 = vsel %vm704, %v347, 0.0
    %v741 = vrot.slane %v740, 4
    %v742 = vadd.f32 %v740, %v741
    %v743 = vrot.slane %v742, 2
    %v744 = vadd.f32 %v742, %v743
    %v745 = vrot.slane %v744, 1
    %v746 = vadd.f32 %v744, %v745
    %v747 = vsel %vm704, %v416, 0.0
    %v748 = vrot.slane %v747, 4
    %v749 = vadd.f32 %v747, %v748
    %v750 = vrot.slane %v749, 2
    %v751 = vadd.f32 %v749, %v750
    %v752 = vrot.slane %v751, 1
    %v753 = vadd.f32 %v751, %v752
    %v754 = vsel %vm704, %v418, 0.0
    %v755 = vrot.slane %v754, 4
    %v756 = vadd.f32 %v754, %v755
    %v757 = vrot.slane %v756, 2
    %v758 = vadd.f32 %v756, %v757
    %v759 = vrot.slane %v758, 1
    %v760 = vadd.f32 %v758, %v759
    %v761 = vsel %vm704, %v487, 0.0
    %v762 = vrot.slane %v761, 4
    %v763 = vadd.f32 %v761, %v762
    %v764 = vrot.slane %v763, 2
    %v765 = vadd.f32 %v763, %v764
    %v766 = vrot.slane %v765, 1
    %v767 = vadd.f32 %v765, %v766
    %v768 = vsel %vm704, %v489, 0.0
    %v769 = vrot.slane %v768, 4
    %v770 = vadd.f32 %v768, %v769
    %v771 = vrot.slane %v770, 2
    %v772 = vadd.f32 %v770, %v771
    %v773 = vrot.slane %v772, 1
    %v774 = vadd.f32 %v772, %v773
    %v775 = vsel %vm704, %v558, 0.0
    %v776 = vrot.slane %v775, 4
    %v777 = vadd.f32 %v775, %v776
    %v778 = vrot.slane %v777, 2
    %v779 = vadd.f32 %v777, %v778
    %v780 = vrot.slane %v779, 1
    %v781 = vadd.f32 %v779, %v780
    %v782 = vsel %vm704, %v560, 0.0
    %v783 = vrot.slane %v782, 4
    %v784 = vadd.f32 %v782, %v783
    %v785 = vrot.slane %v784, 2
    %v786 = vadd.f32 %v784, %v785
    %v787 = vrot.slane %v786, 1
    %v788 = vadd.f32 %v786, %v787
    %v789 = vsel %vm704, %v629, 0.0
    %v790 = vrot.slane %v789, 4
    %v791 = vadd.f32 %v789, %v790
    %v792 = vrot.slane %v791, 2
    %v793 = vadd.f32 %v791, %v792
    %v794 = vrot.slane %v793, 1
    %v795 = vadd.f32 %v793, %v794
    %v796 = vsel %vm704, %v631, 0.0
    %v797 = vrot.slane %v796, 4
    %v798 = vadd.f32 %v796, %v797
    %v799 = vrot.slane %v798, 2
    %v800 = vadd.f32 %v798, %v799
    %v801 = vrot.slane %v800, 1
    %v802 = vadd.f32 %v800, %v801
    %v803 = vsel %vm704, %v700, 0.0
    %v804 = vrot.slane %v803, 4
    %v805 = vadd.f32 %v803, %v804
    %v806 = vrot.slane %v805, 2
    %v807 = vadd.f32 %v805, %v806
    %v808 = vrot.slane %v807, 1
    %v809 = vadd.f32 %v807, %v808
    %v810 = vsel %vm704, %v702, 0.0
    %v811 = vrot.slane %v810, 4
    %v812 = vadd.f32 %v810, %v811
    %v813 = vrot.slane %v812, 2
    %v814 = vadd.f32 %v812, %v813
    %v815 = vrot.slane %v814, 1
    %v816 = vadd.f32 %v814, %v815
    %v817 = vrcp.pop 2.0
    %v818 = vmul.f32 %v711, %v817
    %v819 = vmul.f32 %v718, %v817
    %v820 = vmul.f32 %v725, %v817
    %v821 = vmul.f32 %v732, %v817
    %v822 = vmul.f32 %v739, %v817
    %v823 = vmul.f32 %v746, %v817
    %v824 = vmul.f32 %v753, %v817
    %v825 = vmul.f32 %v760, %v817
    %v826 = vmul.f32 %v767, %v817
    %v827 = vmul.f32 %v774, %v817
    %v828 = vmul.f32 %v781, %v817
    %v829 = vmul.f32 %v788, %v817
    %v830 = vmul.f32 %v795, %v817
    %v831 = vmul.f32 %v802, %v817
    %v832 = vmul.f32 %v809, %v817
    %v833 = vmul.f32 %v816, %v817
    %v834 = vsub.f32 %v203, %v818
    %v835 = vsub.f32 %v205, %v819
    %v836 = vsub.f32 %v274, %v820
    %v837 = vsub.f32 %v276, %v821
    %v838 = vsub.f32 %v345, %v822
    %v839 = vsub.f32 %v347, %v823
    %v840 = vsub.f32 %v416, %v824
    %v841 = vsub.f32 %v418, %v825
    %v842 = vsub.f32 %v487, %v826
    %v843 = vsub.f32 %v489, %v827
    %v844 = vsub.f32 %v558, %v828
    %v845 = vsub.f32 %v560, %v829
    %v846 = vsub.f32 %v629, %v830
    %v847 = vsub.f32 %v631, %v831
    %v848 = vsub.f32 %v700, %v832
    %v849 = vsub.f32 %v702, %v833
    %v850 = vmul.f32 %v834, %v834
    %v851 = vmul.f32 %v835, %v835
    %v852 = vmul.f32 %v836, %v836
    %v853 = vmul.f32 %v837, %v837
    %v854 = vmul.f32 %v838, %v838
    %v855 = vmul.f32 %v839, %v839
    %v856 = vmul.f32 %v840, %v840
    %v857 = vmul.f32 %v841, %v841
    %v858 = vmul.f32 %v842, %v842
    %v859 = vmul.f32 %v843, %v843
    %v860 = vmul.f32 %v844, %v844
    %v861 = vmul.f32 %v845, %v845
    %v862 = vmul.f32 %v846, %v846
    %v863 = vmul.f32 %v847, %v847
    %v864 = vmul.f32 %v848, %v848
    %v865 = vmul.f32 %v849, %v849
    %v866 = vsel %vm704, %v850, 0.0
    %v867 = vrot.slane %v866, 4
    %v868 = vadd.f32 %v866, %v867
    %v869 = vrot.slane %v868, 2
    %v870 = vadd.f32 %v868, %v869
    %v871 = vrot.slane %v870, 1
    %v872 = vadd.f32 %v870, %v871
    %v873 = vsel %vm704, %v851, 0.0
    %v874 = vrot.slane %v873, 4
    %v875 = vadd.f32 %v873, %v874
    %v876 = vrot.slane %v875, 2
    %v877 = vadd.f32 %v875, %v876
    %v878 = vrot.slane %v877, 1
    %v879 = vadd.f32 %v877, %v878
    %v880 = vsel %vm704, %v852, 0.0
    %v881 = vrot.slane %v880, 4
    %v882 = vadd.f32 %v880, %v881
    %v883 = vrot.slane %v882, 2
    %v884 = vadd.f32 %v882, %v883
    %v885 = vrot.slane %v884, 1
    %v886 = vadd.f32 %v884, %v885
    %v887 = vsel %vm704, %v853, 0.0
    %v888 = vrot.slane %v887, 4
    %v889 = vadd.f32 %v887, %v888
    %v890 = vrot.slane %v889, 2
    %v891 = vadd.f32 %v889, %v890
    %v892 = vrot.slane %v891, 1
    %v893 = vadd.f32 %v891, %v892
    %v894 = vsel %vm704, %v854, 0.0
    %v895 = vrot.slane %v894, 4
    %v896 = vadd.f32 %v894, %v895
    %v897 = vrot.slane %v896, 2
    %v898 = vadd.f32 %v896, %v897
    %v899 = vrot.slane %v898, 1
    %v900 = vadd.f32 %v898, %v899
    %v901 = vsel %vm704, %v855, 0.0
    %v902 = vrot.slane %v901, 4
    %v903 = vadd.f32 %v901, %v902
    %v904 = vrot.slane %v903, 2
    %v905 = vadd.f32 %v903, %v904
    %v906 = vrot.slane %v905, 1
    %v907 = vadd.f32 %v905, %v906
    %v908 = vsel %vm704, %v856, 0.0
    %v909 = vrot.slane %v908, 4
    %v910 = vadd.f32 %v908, %v909
    %v911 = vrot.slane %v910, 2
    %v912 = vadd.f32 %v910, %v911
    %v913 = vrot.slane %v912, 1
    %v914 = vadd.f32 %v912, %v913
    %v915 = vsel %vm704, %v857, 0.0
    %v916 = vrot.slane %v915, 4
    %v917 = vadd.f32 %v915, %v916
    %v918 = vrot.slane %v917, 2
    %v919 = vadd.f32 %v917, %v918
    %v920 = vrot.slane %v919, 1
    %v921 = vadd.f32 %v919, %v920
    %v922 = vsel %vm704, %v858, 0.0
    %v923 = vrot.slane %v922, 4
    %v924 = vadd.f32 %v922, %v923
    %v925 = vrot.slane %v924, 2
    %v926 = vadd.f32 %v924, %v925
    %v927 = vrot.slane %v926, 1
    %v928 = vadd.f32 %v926, %v927
    %v929 = vsel %vm704, %v859, 0.0
    %v930 = vrot.slane %v929, 4
    %v931 = vadd.f32 %v929, %v930
    %v932 = vrot.slane %v931, 2
    %v933 = vadd.f32 %v931, %v932
    %v934 = vrot.slane %v933, 1
    %v935 = vadd.f32 %v933, %v934
    %v936 = vsel %vm704, %v860, 0.0
    %v937 = vrot.slane %v936, 4
    %v938 = vadd.f32 %v936, %v937
    %v939 = vrot.slane %v938, 2
    %v940 = vadd.f32 %v938, %v939
    %v941 = vrot.slane %v940, 1
    %v942 = vadd.f32 %v940, %v941
    %v943 = vsel %vm704, %v861, 0.0
    %v944 = vrot.slane %v943, 4
    %v945 = vadd.f32 %v943, %v944
    %v946 = vrot.slane %v945, 2
    %v947 = vadd.f32 %v945, %v946
    %v948 = vrot.slane %v947, 1
    %v949 = vadd.f32 %v947, %v948
    %v950 = vsel %vm704, %v862, 0.0
    %v951 = vrot.slane %v950, 4
    %v952 = vadd.f32 %v950, %v951
    %v953 = vrot.slane %v952, 2
    %v954 = vadd.f32 %v952, %v953
    %v955 = vrot.slane %v954, 1
    %v956 = vadd.f32 %v954, %v955
    %v957 = vsel %vm704, %v863, 0.0
    %v958 = vrot.slane %v957, 4
    %v959 = vadd.f32 %v957, %v958
    %v960 = vrot.slane %v959, 2
    %v961 = vadd.f32 %v959, %v960
    %v962 = vrot.slane %v961, 1
    %v963 = vadd.f32 %v961, %v962
    %v964 = vsel %vm704, %v864, 0.0
    %v965 = vrot.slane %v964, 4
    %v966 = vadd.f32 %v964, %v965
    %v967 = vrot.slane %v966, 2
    %v968 = vadd.f32 %v966, %v967
    %v969 = vrot.slane %v968, 1
    %v970 = vadd.f32 %v968, %v969
    %v971 = vsel %vm704, %v865, 0.0
    %v972 = vrot.slane %v971, 4
    %v973 = vadd.f32 %v971, %v972
    %v974 = vrot.slane %v973, 2
    %v975 = vadd.f32 %v973, %v974
    %v976 = vrot.slane %v975, 1
    %v977 = vadd.f32 %v975, %v976
    %v978 = vmul.f32 %v872, %v817
    %v979 = vmul.f32 %v879, %v817
    %v980 = vmul.f32 %v886, %v817
    %v981 = vmul.f32 %v893, %v817
    %v982 = vmul.f32 %v900, %v817
    %v983 = vmul.f32 %v907, %v817
    %v984 = vmul.f32 %v914, %v817
    %v985 = vmul.f32 %v921, %v817
    %v986 = vmul.f32 %v928, %v817
    %v987 = vmul.f32 %v935, %v817
    %v988 = vmul.f32 %v942, %v817
    %v989 = vmul.f32 %v949, %v817
    %v990 = vmul.f32 %v956, %v817
    %v991 = vmul.f32 %v963, %v817
    %v992 = vmul.f32 %v970, %v817
    %v993 = vmul.f32 %v977, %v817
    %v994 = vadd.f32 %v978, 1e-05
    %v995 = vadd.f32 %v979, 1e-05
    %v996 = vadd.f32 %v980, 1e-05
    %v997 = vadd.f32 %v981, 1e-05
    %v998 = vadd.f32 %v982, 1e-05
    %v999 = vadd.f32 %v983, 1e-05
    %v1000 = vadd.f32 %v984, 1e-05
    %v1001 = vadd.f32 %v985, 1e-05
    %v1002 = vadd.f32 %v986, 1e-05
    %v1003 = vadd.f32 %v987, 1e-05
    %v1004 = vadd.f32 %v988, 1e-05
    %v1005 = vadd.f32 %v989, 1e-05
    %v1006 = vadd.f32 %v990, 1e-05
    %v1007 = vadd.f32 %v991, 1e-05
    %v1008 = vadd.f32 %v992, 1e-05
    %v1009 = vadd.f32 %v993, 1e-05
    %v1010 = vrsqrt.pop %v994
    %v1011 = vrsqrt.pop %v995
    %v1012 = vrsqrt.pop %v996
    %v1013 = vrsqrt.pop %v997
    %v1014 = vrsqrt.pop %v998
    %v1015 = vrsqrt.pop %v999
    %v1016 = vrsqrt.pop %v1000
    %v1017 = vrsqrt.pop %v1001
    %v1018 = vrsqrt.pop %v1002
    %v1019 = vrsqrt.pop %v1003
    %v1020 = vrsqrt.pop %v1004
    %v1021 = vrsqrt.pop %v1005
    %v1022 = vrsqrt.pop %v1006
    %v1023 = vrsqrt.pop %v1007
    %v1024 = vrsqrt.pop %v1008
    %v1025 = vrsqrt.pop %v1009
    %v1026 = vmul.f32 %v834, %v1010
    %v1027 = vmul.f32 %v835, %v1011
    %v1028 = vmul.f32 %v836, %v1012
    %v1029 = vmul.f32 %v837, %v1013
    %v1030 = vmul.f32 %v838, %v1014
    %v1031 = vmul.f32 %v839, %v1015
    %v1032 = vmul.f32 %v840, %v1016
    %v1033 = vmul.f32 %v841, %v1017
    %v1034 = vmul.f32 %v842, %v1018
    %v1035 = vmul.f32 %v843, %v1019
    %v1036 = vmul.f32 %v844, %v1020
    %v1037 = vmul.f32 %v845, %v1021
    %v1038 = vmul.f32 %v846, %v1022
    %v1039 = vmul.f32 %v847, %v1023
    %v1040 = vmul.f32 %v848, %v1024
    %v1041 = vmul.f32 %v849, %v1025
    %v1042 = vld [vmem:[#allocation7] sm:$0xff]
    %v1043 = vld [vmem:[#allocation7 + $0x8] sm:$0xff]
    %v1046 = vlaneseq
    %v1047 = vshrl.u32 %v1046, 7
    %v1048 = vsub.s32 0, %v1047
    %v1049 = vrot.slane %v1042, %v1048
    %v1050 = vlaneseq
    %v1051 = vshrl.u32 %v1050, 7
    %v1052 = vsub.s32 1, %v1051
    %v1053 = vrot.slane %v1042, %v1052
    %v1054 = vlaneseq
    %v1055 = vshrl.u32 %v1054, 7
    %v1056 = vsub.s32 2, %v1055
    %v1057 = vrot.slane %v1042, %v1056
    %v1058 = vlaneseq
    %v1059 = vshrl.u32 %v1058, 7
    %v1060 = vsub.s32 3, %v1059
    %v1061 = vrot.slane %v1042, %v1060
    %v1062 = vlaneseq
    %v1063 = vshrl.u32 %v1062, 7
    %v1064 = vsub.s32 4, %v1063
    %v1065 = vrot.slane %v1042, %v1064
    %v1066 = vlaneseq
    %v1067 = vshrl.u32 %v1066, 7
    %v1068 = vsub.s32 5, %v1067
    %v1069 = vrot.slane %v1042, %v1068
    %v1070 = vlaneseq
    %v1071 = vshrl.u32 %v1070, 7
    %v1072 = vsub.s32 6, %v1071
    %v1073 = vrot.slane %v1042, %v1072
    %v1074 = vlaneseq
    %v1075 = vshrl.u32 %v1074, 7
    %v1076 = vsub.s32 7, %v1075
    %v1077 = vrot.slane %v1042, %v1076
    %v1078 = vlaneseq
    %v1079 = vshrl.u32 %v1078, 7
    %v1080 = vsub.s32 0, %v1079
    %v1081 = vrot.slane %v1043, %v1080
    %v1082 = vlaneseq
    %v1083 = vshrl.u32 %v1082, 7
    %v1084 = vsub.s32 1, %v1083
    %v1085 = vrot.slane %v1043, %v1084
    %v1086 = vlaneseq
    %v1087 = vshrl.u32 %v1086, 7
    %v1088 = vsub.s32 2, %v1087
    %v1089 = vrot.slane %v1043, %v1088
    %v1090 = vlaneseq
    %v1091 = vshrl.u32 %v1090, 7
    %v1092 = vsub.s32 3, %v1091
    %v1093 = vrot.slane %v1043, %v1092
    %v1094 = vlaneseq
    %v1095 = vshrl.u32 %v1094, 7
    %v1096 = vsub.s32 4, %v1095
    %v1097 = vrot.slane %v1043, %v1096
    %v1098 = vlaneseq
    %v1099 = vshrl.u32 %v1098, 7
    %v1100 = vsub.s32 5, %v1099
    %v1101 = vrot.slane %v1043, %v1100
    %v1102 = vlaneseq
    %v1103 = vshrl.u32 %v1102, 7
    %v1104 = vsub.s32 6, %v1103
    %v1105 = vrot.slane %v1043, %v1104
    %v1106 = vlaneseq
    %v1107 = vshrl.u32 %v1106, 7
    %v1108 = vsub.s32 7, %v1107
    %v1109 = vrot.slane %v1043, %v1108
    %v1126 = vmul.f32 %v1026, %v1049
    %v1127 = vmul.f32 %v1027, %v1053
    %v1128 = vmul.f32 %v1028, %v1057
    %v1129 = vmul.f32 %v1029, %v1061
    %v1130 = vmul.f32 %v1030, %v1065
    %v1131 = vmul.f32 %v1031, %v1069
    %v1132 = vmul.f32 %v1032, %v1073
    %v1133 = vmul.f32 %v1033, %v1077
    %v1134 = vmul.f32 %v1034, %v1081
    %v1135 = vmul.f32 %v1035, %v1085
    %v1136 = vmul.f32 %v1036, %v1089
    %v1137 = vmul.f32 %v1037, %v1093
    %v1138 = vmul.f32 %v1038, %v1097
    %v1139 = vmul.f32 %v1039, %v1101
    %v1140 = vmul.f32 %v1040, %v1105
    %v1141 = vmul.f32 %v1041, %v1109
    %v1142 = vld [vmem:[#allocation8] sm:$0xff]
    %v1143 = vld [vmem:[#allocation8 + $0x8] sm:$0xff]
    %v1146 = vlaneseq
    %v1147 = vshrl.u32 %v1146, 7
    %v1148 = vsub.s32 0, %v1147
    %v1149 = vrot.slane %v1142, %v1148
    %v1150 = vlaneseq
    %v1151 = vshrl.u32 %v1150, 7
    %v1152 = vsub.s32 1, %v1151
    %v1153 = vrot.slane %v1142, %v1152
    %v1154 = vlaneseq
    %v1155 = vshrl.u32 %v1154, 7
    %v1156 = vsub.s32 2, %v1155
    %v1157 = vrot.slane %v1142, %v1156
    %v1158 = vlaneseq
    %v1159 = vshrl.u32 %v1158, 7
    %v1160 = vsub.s32 3, %v1159
    %v1161 = vrot.slane %v1142, %v1160
    %v1162 = vlaneseq
    %v1163 = vshrl.u32 %v1162, 7
    %v1164 = vsub.s32 4, %v1163
    %v1165 = vrot.slane %v1142, %v1164
    %v1166 = vlaneseq
    %v1167 = vshrl.u32 %v1166, 7
    %v1168 = vsub.s32 5, %v1167
    %v1169 = vrot.slane %v1142, %v1168
    %v1170 = vlaneseq
    %v1171 = vshrl.u32 %v1170, 7
    %v1172 = vsub.s32 6, %v1171
    %v1173 = vrot.slane %v1142, %v1172
    %v1174 = vlaneseq
    %v1175 = vshrl.u32 %v1174, 7
    %v1176 = vsub.s32 7, %v1175
    %v1177 = vrot.slane %v1142, %v1176
    %v1178 = vlaneseq
    %v1179 = vshrl.u32 %v1178, 7
    %v1180 = vsub.s32 0, %v1179
    %v1181 = vrot.slane %v1143, %v1180
    %v1182 = vlaneseq
    %v1183 = vshrl.u32 %v1182, 7
    %v1184 = vsub.s32 1, %v1183
    %v1185 = vrot.slane %v1143, %v1184
    %v1186 = vlaneseq
    %v1187 = vshrl.u32 %v1186, 7
    %v1188 = vsub.s32 2, %v1187
    %v1189 = vrot.slane %v1143, %v1188
    %v1190 = vlaneseq
    %v1191 = vshrl.u32 %v1190, 7
    %v1192 = vsub.s32 3, %v1191
    %v1193 = vrot.slane %v1143, %v1192
    %v1194 = vlaneseq
    %v1195 = vshrl.u32 %v1194, 7
    %v1196 = vsub.s32 4, %v1195
    %v1197 = vrot.slane %v1143, %v1196
    %v1198 = vlaneseq
    %v1199 = vshrl.u32 %v1198, 7
    %v1200 = vsub.s32 5, %v1199
    %v1201 = vrot.slane %v1143, %v1200
    %v1202 = vlaneseq
    %v1203 = vshrl.u32 %v1202, 7
    %v1204 = vsub.s32 6, %v1203
    %v1205 = vrot.slane %v1143, %v1204
    %v1206 = vlaneseq
    %v1207 = vshrl.u32 %v1206, 7
    %v1208 = vsub.s32 7, %v1207
    %v1209 = vrot.slane %v1143, %v1208
    %v1226 = vadd.f32 %v1126, %v1149
    %v1227 = vadd.f32 %v1127, %v1153
    %v1228 = vadd.f32 %v1128, %v1157
    %v1229 = vadd.f32 %v1129, %v1161
    %v1230 = vadd.f32 %v1130, %v1165
    %v1231 = vadd.f32 %v1131, %v1169
    %v1232 = vadd.f32 %v1132, %v1173
    %v1233 = vadd.f32 %v1133, %v1177
    %v1234 = vadd.f32 %v1134, %v1181
    %v1235 = vadd.f32 %v1135, %v1185
    %v1236 = vadd.f32 %v1136, %v1189
    %v1237 = vadd.f32 %v1137, %v1193
    %v1238 = vadd.f32 %v1138, %v1197
    %v1239 = vadd.f32 %v1139, %v1201
    %v1240 = vadd.f32 %v1140, %v1205
    %v1241 = vadd.f32 %v1141, %v1209
    %v1242 = vmax.f32 %v1226, 0.0
    %v1243 = vmax.f32 %v1227, 0.0
    %v1244 = vmax.f32 %v1228, 0.0
    %v1245 = vmax.f32 %v1229, 0.0
    %v1246 = vmax.f32 %v1230, 0.0
    %v1247 = vmax.f32 %v1231, 0.0
    %v1248 = vmax.f32 %v1232, 0.0
    %v1249 = vmax.f32 %v1233, 0.0
    %v1250 = vmax.f32 %v1234, 0.0
    %v1251 = vmax.f32 %v1235, 0.0
    %v1252 = vmax.f32 %v1236, 0.0
    %v1253 = vmax.f32 %v1237, 0.0
    %v1254 = vmax.f32 %v1238, 0.0
    %v1255 = vmax.f32 %v1239, 0.0
    %v1256 = vmax.f32 %v1240, 0.0
    %v1257 = vmax.f32 %v1241, 0.0
    %v1274 = vcombine.low %v1242, %v1243
    %v1275 = vcombine.low %v1244, %v1245
    %v1277 = vunpack.c.l.s4 1983009808
    %v1278 = vunpack.c.0.s8 %v1277
    %v1279 = vlaneseq
    %v1280 = vshrl.u32 %v1279, 7
    %v1281 = vsub.s32 %v1278, %v1280
    %v1282 = vrot.slane %v1274, %v1281
    %v1284 = vunpack.c.l.s4 1983009808
    %v1285 = vunpack.c.0.s8 %v1284
    %v1286 = vlaneseq
    %v1287 = vshrl.u32 %v1286, 7
    %v1288 = vsub.s32 %v1285, %v1287
    %v1289 = vrot.slane %v1275, %v1288
    %v1290 = vcombine.low %v1282, %v1289
    %v1291 = vcombine.low %v1246, %v1247
    %v1292 = vcombine.low %v1248, %v1249
    %v1294 = vunpack.c.l.s4 1983009808
    %v1295 = vunpack.c.0.s8 %v1294
    %v1296 = vlaneseq
    %v1297 = vshrl.u32 %v1296, 7
    %v1298 = vsub.s32 %v1295, %v1297
    %v1299 = vrot.slane %v1291, %v1298
    %v1301 = vunpack.c.l.s4 1983009808
    %v1302 = vunpack.c.0.s8 %v1301
    %v1303 = vlaneseq
    %v1304 = vshrl.u32 %v1303, 7
    %v1305 = vsub.s32 %v1302, %v1304
    %v1306 = vrot.slane %v1292, %v1305
    %v1307 = vcombine.low %v1299, %v1306
    %v1308 = vcombine.low %v1250, %v1251
    %v1309 = vcombine.low %v1252, %v1253
    %v1311 = vunpack.c.l.s4 1983009808
    %v1312 = vunpack.c.0.s8 %v1311
    %v1313 = vlaneseq
    %v1314 = vshrl.u32 %v1313, 7
    %v1315 = vsub.s32 %v1312, %v1314
    %v1316 = vrot.slane %v1308, %v1315
    %v1318 = vunpack.c.l.s4 1983009808
    %v1319 = vunpack.c.0.s8 %v1318
    %v1320 = vlaneseq
    %v1321 = vshrl.u32 %v1320, 7
    %v1322 = vsub.s32 %v1319, %v1321
    %v1323 = vrot.slane %v1309, %v1322
    %v1324 = vcombine.low %v1316, %v1323
    %v1325 = vcombine.low %v1254, %v1255
    %v1326 = vcombine.low %v1256, %v1257
    %v1328 = vunpack.c.l.s4 1983009808
    %v1329 = vunpack.c.0.s8 %v1328
    %v1330 = vlaneseq
    %v1331 = vshrl.u32 %v1330, 7
    %v1332 = vsub.s32 %v1329, %v1331
    %v1333 = vrot.slane %v1325, %v1332
    %v1335 = vunpack.c.l.s4 1983009808
    %v1336 = vunpack.c.0.s8 %v1335
    %v1337 = vlaneseq
    %v1338 = vshrl.u32 %v1337, 7
    %v1339 = vsub.s32 %v1336, %v1338
    %v1340 = vrot.slane %v1326, %v1339
    %v1341 = vcombine.low %v1333, %v1340
    %1346 = vst [vmem:[#allocation10] sm:$0xff] %v1290
    %1347 = vst [vmem:[#allocation10 + $0x8] sm:$0xff] %v1307
    %1348 = vst [vmem:[#allocation10 + $0x10] sm:$0xff] %v1324
    %1349 = vst [vmem:[#allocation10 + $0x18] sm:$0xff] %v1341
    // Predicated region
    $region34: #{tpu_custom_call.1} parent=1 // pred_check
      _
    $region35: #{tpu_custom_call.1} parent=1 // pred_check_branch
      %1351 = sbr.rel (0) target = $region37
    $region36: #{tpu_custom_call.1} parent=1 // pred_region
      %s1353 = ssub.s32 512, 512
      %1354 = vsyncadd [#allocation4], %s1353
      %s1356 = sshll.u32 [#allocation10], 4
      %s1357 = int_to_ptr.vmem [resolvable:$true] %s1356
      %1359 = dma.vmem_to_hbm [thread:$0]  %s1357, 512, %s4, [#allocation4]
    $region37: #{tpu_custom_call.1} parent=1 // pred_fallthru
      _
    // Predicated region
    $region38: #{tpu_custom_call.1} parent=1 // pred_check
      _
    $region39: #{tpu_custom_call.1} parent=1 // pred_check_branch
      %1361 = sbr.rel (0) target = $region41
    $region40: #{tpu_custom_call.1} parent=1 // pred_region
      %1362 = dma.done [#allocation4], 512
    $region41: #{tpu_custom_call.1} parent=1 // pred_fallthru
      _
    %1363 = vsyncpa [#allocation3], 1
    %1364 = vsyncpa [#allocation6], 1
    %1365 = vsyncpa [#allocation9], 1
    %1366 = vsyncpa [#allocation4], 1

</llo_original>
